<compile_context>
chip_gen: v5e
topology: v5e:2x2
jax: 0.10.0
libtpu: 0.0.40
codegen_flags: <defaults>
</compile_context>

<pallas_src>
import functools

import jax
import jax.numpy as jnp
from jax.experimental import pallas as pl
from jax.experimental.pallas import tpu as pltpu

_MIB = 1 << 20


def _tpu_vmem_bytes():
    """Per-core physical VMEM in bytes; conservative fallback if query fails."""
    try:
        info = pltpu.get_tpu_info()
        for attr in ("vmem_capacity_bytes", "vmem_size_bytes", "vmem_bytes"):
            v = getattr(info, attr, None)
            if v:
                return int(v)
    except Exception:
        pass
    return 64 * _MIB  # v7x has the smallest per-TC VMEM; safe default


# ---------------------------------------------------------------------------
# Fused single-pass kernel: one whole (C, HW) image slab resident in VMEM.
# ---------------------------------------------------------------------------
def _scse_fused_kernel(x_ref, w1t_ref, b1_ref, w2t_ref, b2_ref, ws_ref, bs_ref,
                       o_ref, *, inv_hw):
    """x_ref/o_ref: (1, C, HW).  Weights are tiny, column-vector layouts."""
    x = x_ref[0]                                           # (C, HW), native dtype

    # Global average pool along lanes via MXU (f32 accumulation; avoids a full
    # f32 upcast of the slab; MXU slot is free filler in an HBM-bound kernel).
    ones = jnp.ones((x.shape[1], 1), dtype=x.dtype)
    pooled = jnp.dot(x, ones, preferred_element_type=jnp.float32) * inv_hw  # (C, 1)

    # cSE MLP (tiny) in column form so the result broadcasts over lanes.
    z1 = jnp.maximum(
        jnp.dot(w1t_ref[...], pooled, preferred_element_type=jnp.float32)
        + b1_ref[...], 0.0)                                # (Cr, 1)
    c_scale = jax.nn.sigmoid(
        jnp.dot(w2t_ref[...], z1, preferred_element_type=jnp.float32)
        + b2_ref[...])                                     # (C, 1)

    # sSE: 1x1 conv over channels -> lane-dense (1, HW) MXU output.
    s = jnp.dot(ws_ref[...], x, preferred_element_type=jnp.float32) + bs_ref[...]
    s_scale = jax.nn.sigmoid(s)                            # (1, HW), f32

    # Fused apply: x*cSE + x*sSE == x*(cSE + sSE).  Only the small scales are
    # cast, so bf16 inputs never produce a full-slab f32 intermediate.
    scale = c_scale.astype(x.dtype) + s_scale.astype(x.dtype)    # (C, HW)
    o_ref[0] = (x * scale).astype(o_ref.dtype)


# ---------------------------------------------------------------------------
# Two-pass fallback: tiled "apply" kernel (cSE scale precomputed in JAX).
# ---------------------------------------------------------------------------
def _scse_apply_kernel(x_ref, cs_ref, ws_ref, bs_ref, o_ref):
    """x_ref/o_ref: (1, C, T); cs_ref: (1, C, 1); ws_ref: (1, C); bs_ref: (1, 1)."""
    x = x_ref[0]                                           # (C, T), native dtype

    # sSE: per-pixel 1x1 conv over channels -> lane-dense (1, T) MXU output.
    s = jnp.dot(ws_ref[...], x, preferred_element_type=jnp.float32) + bs_ref[...]
    s_scale = jax.nn.sigmoid(s)                            # (1, T), f32

    scale = cs_ref[0].astype(x.dtype) + s_scale.astype(x.dtype)  # (C, T)
    o_ref[0] = (x * scale).astype(o_ref.dtype)


def _pick_hw_tile(hw, c, itemsize, max_tile_bytes):
    """Lane-dense (multiple-of-128) HW tile under the byte budget.

    No divisibility requirement: the grid uses pl.cdiv and Pallas pads/masks
    the ragged tail block (padding only reaches lanes whose outputs are
    discarded -- the kernel never mixes across lanes).
    """
    bytes_per_col = max(1, c * itemsize)
    cap = max(128, (max_tile_bytes // bytes_per_col) // 128 * 128)
    if hw <= cap:
        return hw                       # one full-extent block per image (legal)
    num_tiles = pl.cdiv(hw, cap)
    return int(pl.cdiv(pl.cdiv(hw, num_tiles), 128) * 128)   # balanced tiles


@functools.partial(jax.jit, static_argnames=("hw_tile", "force_two_pass"))
def scse_forward(x_nchw, w1, b1, w2, b2, ws, bs, *, hw_tile=None,
                 force_two_pass=False):
    """SCSE forward.

    x_nchw: (N, C, H, W)
    w1: (C, Cr), b1: (1, Cr)   cSE conv1 (matmul-ready)
    w2: (Cr, C), b2: (1, C)    cSE conv2 (matmul-ready)
    ws: (1, C),  bs: (1, 1)    sSE conv  (matmul-ready)
    """
    n, c, h, w = x_nchw.shape
    hw = h * w
    itemsize = x_nchw.dtype.itemsize
    x3 = x_nchw.reshape(n, c, hw)                 # free reshape, no transpose

    # Generation-aware VMEM budget (v5e/v6e: 64 MiB, v7x: ~45 MiB).
    vmem_budget = min(int(_tpu_vmem_bytes() * 0.7), 64 * _MIB)

    slab_bytes = c * hw * itemsize
    # Fused footprint ~ 4x slab (double-buffered in/out) + ~2x intermediates;
    # require 8x slab to fit for comfortable headroom.
    use_fused = (not force_two_pass) and (hw_tile is None) and \
        (8 * slab_bytes <= vmem_budget)

    ws_x = ws.astype(x_nchw.dtype)                # keep the big dot homogeneous
    bs_f = bs.reshape(1, 1).astype(jnp.float32)

    if use_fused:
        # -------- single-pass: 1 read + 1 write of x --------
        cr = w1.shape[1]
        w1t = w1.T.astype(jnp.float32)            # (Cr, C)
        b1c = b1.reshape(cr, 1).astype(jnp.float32)
        w2t = w2.T.astype(jnp.float32)            # (C, Cr)
        b2c = b2.reshape(c, 1).astype(jnp.float32)

        out = pl.pallas_call(
            functools.partial(_scse_fused_kernel, inv_hw=1.0 / hw),
            out_shape=jax.ShapeDtypeStruct((n, c, hw), x_nchw.dtype),
            grid_spec=pltpu.PrefetchScalarGridSpec(
                num_scalar_prefetch=0,
                grid=(n,),
                in_specs=[
                    pl.BlockSpec((1, c, hw), lambda i: (i, 0, 0)),   # x slab
                    pl.BlockSpec((cr, c), lambda i: (0, 0)),         # w1^T
                    pl.BlockSpec((cr, 1), lambda i: (0, 0)),         # b1
                    pl.BlockSpec((c, cr), lambda i: (0, 0)),         # w2^T
                    pl.BlockSpec((c, 1), lambda i: (0, 0)),          # b2
                    pl.BlockSpec((1, c), lambda i: (0, 0)),          # ws
                    pl.BlockSpec((1, 1), lambda i: (0, 0)),          # bs
                ],
                out_specs=pl.BlockSpec((1, c, hw), lambda i: (i, 0, 0)),
            ),
            compiler_params=pltpu.CompilerParams(
                dimension_semantics=("parallel",),
                vmem_limit_bytes=vmem_budget),
            cost_estimate=pl.CostEstimate(
                flops=6 * n * c * hw,
                transcendentals=n * (hw + c),
                bytes_accessed=2 * n * c * hw * itemsize),
        )(x3, w1t, b1c, w2t, b2c, ws_x, bs_f)
        return out.reshape(n, c, h, w)

    # -------- two-pass fallback: JAX pooling + cSE MLP, then tiled apply ----
    pooled = jnp.mean(x3.astype(jnp.float32), axis=2)            # (N, C)
    z1 = jnp.maximum(pooled @ w1 + b1, 0.0)                      # (N, Cr)
    c_scale = jax.nn.sigmoid(z1 @ w2 + b2)                       # (N, C)
    cs = c_scale.reshape(n, c, 1).astype(jnp.float32)            # (N, C, 1)

    if hw_tile is None:
        # ~vmem_budget/10 per tile (capped 2..6 MiB): 2x in + 2x out buffers
        # plus intermediates stay well under the explicit vmem limit.
        max_tile_bytes = min(6 * _MIB, max(2 * _MIB, vmem_budget // 10))
        hw_tile = _pick_hw_tile(hw, c, itemsize, max_tile_bytes)
    num_hw_tiles = int(pl.cdiv(hw, hw_tile))

    out = pl.pallas_call(
        _scse_apply_kernel,
        out_shape=jax.ShapeDtypeStruct((n, c, hw), x_nchw.dtype),
        grid_spec=pltpu.PrefetchScalarGridSpec(
            num_scalar_prefetch=0,
            grid=(n, num_hw_tiles),
            in_specs=[
                pl.BlockSpec((1, c, hw_tile), lambda i, j: (i, 0, j)),  # x
                pl.BlockSpec((1, c, 1), lambda i, j: (i, 0, 0)),        # c_scale
                pl.BlockSpec((1, c), lambda i, j: (0, 0)),              # ws
                pl.BlockSpec((1, 1), lambda i, j: (0, 0)),              # bs
            ],
            out_specs=pl.BlockSpec((1, c, hw_tile), lambda i, j: (i, 0, j)),
        ),
        compiler_params=pltpu.CompilerParams(
            dimension_semantics=("parallel", "parallel"),
            vmem_limit_bytes=vmem_budget),
        cost_estimate=pl.CostEstimate(
            flops=4 * n * c * hw,
            transcendentals=n * hw,
            bytes_accessed=2 * n * c * hw * itemsize),
    )(x3, cs, ws_x, bs_f)
    return out.reshape(n, c, h, w)                # free reshape back to NCHW


def _reference(x, w1, b1, w2, b2, ws, bs):
    """Pure-JAX reference of SCSEModule.forward (NCHW)."""
    xf = x.astype(jnp.float32)
    pooled = jnp.mean(xf, axis=(2, 3))                                   # (N, C)
    z1 = jnp.maximum(pooled @ w1 + b1, 0.0)                              # (N, Cr)
    c_scale = jax.nn.sigmoid(z1 @ w2 + b2)[:, :, None, None]             # (N,C,1,1)
    s = jnp.einsum("oc,nchw->nohw", ws, xf) + bs.reshape(1, 1, 1, 1)     # (N,1,H,W)
    s_scale = jax.nn.sigmoid(s)
    return xf * c_scale + xf * s_scale


if __name__ == "__main__":
    key = jax.random.PRNGKey(0)
    N, C, H, W = 2, 16, 16, 16
    reduction = 4
    Cr = C // reduction

    k_x, k1, k2, k3, k4, k5, k6 = jax.random.split(key, 7)

    x = jax.random.normal(k_x, (N, C, H, W), dtype=jnp.float32)

    # PyTorch Conv2d 1x1 weights are (out, in, 1, 1); we store matmul-ready forms.
    w1 = jax.random.normal(k1, (C, Cr), dtype=jnp.float32) * 0.1   # cSE conv1
    b1 = jax.random.normal(k2, (1, Cr), dtype=jnp.float32) * 0.1
    w2 = jax.random.normal(k3, (Cr, C), dtype=jnp.float32) * 0.1   # cSE conv2
    b2 = jax.random.normal(k4, (1, C), dtype=jnp.float32) * 0.1
    w_s = jax.random.normal(k5, (1, C), dtype=jnp.float32) * 0.1   # sSE conv
    b_s = jax.random.normal(k6, (1, 1), dtype=jnp.float32) * 0.1

    ref = _reference(x, w1, b1, w2, b2, w_s, b_s)

    # 1) Default path: fused single-pass kernel (slab easily fits VMEM here).
    out_fused = jax.block_until_ready(scse_forward(x, w1, b1, w2, b2, w_s, b_s))
    assert out_fused.shape == (N, C, H, W)
    assert jnp.allclose(out_fused, ref, atol=1e-5, rtol=1e-5), "fused mismatch"

    # 2) Two-pass tiled path (even split: HW=256, tile=128 -> grid (2, 2)).
    out_tiled = jax.block_until_ready(
        scse_forward(x, w1, b1, w2, b2, w_s, b_s, hw_tile=128,
                     force_two_pass=True))
    assert jnp.allclose(out_tiled, ref, atol=1e-5, rtol=1e-5), "tiled mismatch"

    # 3) Two-pass tiled path with a ragged cdiv grid (HW=144, tile=128 ->
    #    padded tail block; padded lanes only feed discarded outputs).
    x2 = jax.random.normal(k_x, (N, C, 12, 12), dtype=jnp.float32)
    ref2 = _reference(x2, w1, b1, w2, b2, w_s, b_s)
    out_ragged = jax.block_until_ready(
        scse_forward(x2, w1, b1, w2, b2, w_s, b_s, hw_tile=128,
                     force_two_pass=True))
    assert jnp.allclose(out_ragged, ref2, atol=1e-5, rtol=1e-5), "ragged mismatch"

    print("KERNEL_OK")
</pallas_src>

<mosaic_0001>
module attributes {stable_mosaic.version = 11 : i64} {
  func.func @_scse_fused_kernel(%arg0: i32, %arg1: memref<1x16x256xf32, #tpu.memory_space<vmem>>, %arg2: memref<4x16xf32, #tpu.memory_space<vmem>>, %arg3: memref<4x1xf32, #tpu.memory_space<vmem>>, %arg4: memref<16x4xf32, #tpu.memory_space<vmem>>, %arg5: memref<16x1xf32, #tpu.memory_space<vmem>>, %arg6: memref<1x16xf32, #tpu.memory_space<vmem>>, %arg7: memref<1x1xf32, #tpu.memory_space<vmem>>, %arg8: memref<1x16x256xf32, #tpu.memory_space<vmem>>) attributes {dimension_semantics = [#tpu.dimension_semantics<parallel>], iteration_bounds = array<i64: 2>, scalar_prefetch = 0 : i64, scratch_operands = 0 : i64, tpu.core_type = #tpu.core_type<tc>, window_params = [{transform_indices = @transform_0, window_bounds = array<i64: 1, 16, 256>}, {pipeline_mode = #tpu.pipeline_mode<synchronous>, transform_indices = @transform_1, window_bounds = array<i64: 4, 16>}, {pipeline_mode = #tpu.pipeline_mode<synchronous>, transform_indices = @transform_2, window_bounds = array<i64: 4, 1>}, {pipeline_mode = #tpu.pipeline_mode<synchronous>, transform_indices = @transform_3, window_bounds = array<i64: 16, 4>}, {pipeline_mode = #tpu.pipeline_mode<synchronous>, transform_indices = @transform_4, window_bounds = array<i64: 16, 1>}, {pipeline_mode = #tpu.pipeline_mode<synchronous>, transform_indices = @transform_5, window_bounds = array<i64: 1, 16>}, {pipeline_mode = #tpu.pipeline_mode<synchronous>, transform_indices = @transform_6, window_bounds = array<i64: 1, 1>}, {transform_indices = @transform_7, window_bounds = array<i64: 1, 16, 256>}]} {
    %c0 = arith.constant 0 : index
    %c0_0 = arith.constant 0 : index
    %c0_1 = arith.constant 0 : index
    %0 = vector.load %arg1[%c0, %c0_0, %c0_1] : memref<1x16x256xf32, #tpu.memory_space<vmem>>, vector<1x16x256xf32>
    %1 = vector.shape_cast %0 : vector<1x16x256xf32> to vector<16x256xf32>
    %cst = arith.constant 1.000000e+00 : f32
    %2 = vector.broadcast %cst : f32 to vector<256x1xf32>
    %cst_2 = arith.constant dense<0.000000e+00> : vector<16x1xf32>
    %3 = tpu.matmul %1, %2, %cst_2 {dimension_numbers = #tpu.dot_dimension_numbers<[1], [0], [0], [1], [0, 0, 1, 1], [], []>} : vector<16x256xf32>, vector<256x1xf32>, vector<16x1xf32> -> vector<16x1xf32>
    %cst_3 = arith.constant 3.906250e-03 : f32
    %4 = vector.broadcast %cst_3 : f32 to vector<16x1xf32>
    %5 = arith.mulf %3, %4 : vector<16x1xf32>
    %c0_4 = arith.constant 0 : index
    %c0_5 = arith.constant 0 : index
    %6 = vector.load %arg2[%c0_4, %c0_5] : memref<4x16xf32, #tpu.memory_space<vmem>>, vector<4x16xf32>
    %cst_6 = arith.constant dense<0.000000e+00> : vector<4x1xf32>
    %7 = tpu.matmul %6, %5, %cst_6 {dimension_numbers = #tpu.dot_dimension_numbers<[1], [0], [0], [1], [0, 0, 1, 1], [], []>} : vector<4x16xf32>, vector<16x1xf32>, vector<4x1xf32> -> vector<4x1xf32>
    %c0_7 = arith.constant 0 : index
    %c0_8 = arith.constant 0 : index
    %8 = vector.load %arg3[%c0_7, %c0_8] : memref<4x1xf32, #tpu.memory_space<vmem>>, vector<4x1xf32>
    %9 = arith.addf %7, %8 : vector<4x1xf32>
    %cst_9 = arith.constant 0.000000e+00 : f32
    %10 = vector.broadcast %cst_9 : f32 to vector<4x1xf32>
    %11 = arith.maximumf %9, %10 : vector<4x1xf32>
    %c0_10 = arith.constant 0 : index
    %c0_11 = arith.constant 0 : index
    %12 = vector.load %arg4[%c0_10, %c0_11] : memref<16x4xf32, #tpu.memory_space<vmem>>, vector<16x4xf32>
    %cst_12 = arith.constant dense<0.000000e+00> : vector<16x1xf32>
    %13 = tpu.matmul %12, %11, %cst_12 {dimension_numbers = #tpu.dot_dimension_numbers<[1], [0], [0], [1], [0, 0, 1, 1], [], []>} : vector<16x4xf32>, vector<4x1xf32>, vector<16x1xf32> -> vector<16x1xf32>
    %c0_13 = arith.constant 0 : index
    %c0_14 = arith.constant 0 : index
    %14 = vector.load %arg5[%c0_13, %c0_14] : memref<16x1xf32, #tpu.memory_space<vmem>>, vector<16x1xf32>
    %15 = arith.addf %13, %14 : vector<16x1xf32>
    %16 = arith.negf %15 : vector<16x1xf32>
    %17 = math.exp %16 : vector<16x1xf32>
    %cst_15 = arith.constant 1.000000e+00 : f32
    %18 = vector.broadcast %cst_15 : f32 to vector<16x1xf32>
    %19 = arith.addf %18, %17 : vector<16x1xf32>
    %20 = arith.divf %18, %19 : vector<16x1xf32>
    %c0_16 = arith.constant 0 : index
    %c0_17 = arith.constant 0 : index
    %21 = vector.load %arg6[%c0_16, %c0_17] : memref<1x16xf32, #tpu.memory_space<vmem>>, vector<1x16xf32>
    %cst_18 = arith.constant dense<0.000000e+00> : vector<1x256xf32>
    %22 = tpu.matmul %21, %1, %cst_18 {dimension_numbers = #tpu.dot_dimension_numbers<[1], [0], [0], [1], [0, 0, 1, 1], [], []>} : vector<1x16xf32>, vector<16x256xf32>, vector<1x256xf32> -> vector<1x256xf32>
    %c0_19 = arith.constant 0 : index
    %c0_20 = arith.constant 0 : index
    %23 = vector.load %arg7[%c0_19, %c0_20] : memref<1x1xf32, #tpu.memory_space<vmem>>, vector<1x1xf32>
    %24 = vector.broadcast %23 : vector<1x1xf32> to vector<1x256xf32>
    %25 = arith.addf %22, %24 : vector<1x256xf32>
    %26 = arith.negf %25 : vector<1x256xf32>
    %27 = math.exp %26 : vector<1x256xf32>
    %cst_21 = arith.constant 1.000000e+00 : f32
    %28 = vector.broadcast %cst_21 : f32 to vector<1x256xf32>
    %29 = arith.addf %28, %27 : vector<1x256xf32>
    %30 = arith.divf %28, %29 : vector<1x256xf32>
    %31 = vector.broadcast %20 : vector<16x1xf32> to vector<16x256xf32>
    %32 = vector.broadcast %30 : vector<1x256xf32> to vector<16x256xf32>
    %33 = arith.addf %31, %32 : vector<16x256xf32>
    %34 = arith.mulf %1, %33 : vector<16x256xf32>
    %c0_22 = arith.constant 0 : index
    %c0_23 = arith.constant 0 : index
    %c0_24 = arith.constant 0 : index
    %35 = vector.load %arg8[%c0_22, %c0_23, %c0_24] : memref<1x16x256xf32, #tpu.memory_space<vmem>>, vector<1x16x256xf32>
    %36 = vector.shape_cast %35 : vector<1x16x256xf32> to vector<16x256xf32>
    %37 = vector.shape_cast %34 : vector<16x256xf32> to vector<1x16x256xf32>
    tpu.vector_store %arg8[%c0_22, %c0_23, %c0_24], %37 {strides = array<i32>} : memref<1x16x256xf32, #tpu.memory_space<vmem>>, vector<1x16x256xf32>,
    return
  }
  func.func @transform_0(%arg0: i32) -> (i32, i32, i32) {
    %c0_i32 = arith.constant 0 : i32
    %c0_i32_0 = arith.constant 0 : i32
    %c0_i32_1 = arith.constant 0 : i32
    return %arg0, %c0_i32, %c0_i32_0 : i32, i32, i32
  }
  func.func @transform_1(%arg0: i32) -> (i32, i32) {
    %c0_i32 = arith.constant 0 : i32
    %c0_i32_0 = arith.constant 0 : i32
    %c0_i32_1 = arith.constant 0 : i32
    return %c0_i32, %c0_i32_0 : i32, i32
  }
  func.func @transform_2(%arg0: i32) -> (i32, i32) {
    %c0_i32 = arith.constant 0 : i32
    %c0_i32_0 = arith.constant 0 : i32
    %c0_i32_1 = arith.constant 0 : i32
    return %c0_i32, %c0_i32_0 : i32, i32
  }
  func.func @transform_3(%arg0: i32) -> (i32, i32) {
    %c0_i32 = arith.constant 0 : i32
    %c0_i32_0 = arith.constant 0 : i32
    %c0_i32_1 = arith.constant 0 : i32
    return %c0_i32, %c0_i32_0 : i32, i32
  }
  func.func @transform_4(%arg0: i32) -> (i32, i32) {
    %c0_i32 = arith.constant 0 : i32
    %c0_i32_0 = arith.constant 0 : i32
    %c0_i32_1 = arith.constant 0 : i32
    return %c0_i32, %c0_i32_0 : i32, i32
  }
  func.func @transform_5(%arg0: i32) -> (i32, i32) {
    %c0_i32 = arith.constant 0 : i32
    %c0_i32_0 = arith.constant 0 : i32
    %c0_i32_1 = arith.constant 0 : i32
    return %c0_i32, %c0_i32_0 : i32, i32
  }
  func.func @transform_6(%arg0: i32) -> (i32, i32) {
    %c0_i32 = arith.constant 0 : i32
    %c0_i32_0 = arith.constant 0 : i32
    %c0_i32_1 = arith.constant 0 : i32
    return %c0_i32, %c0_i32_0 : i32, i32
  }
  func.func @transform_7(%arg0: i32) -> (i32, i32, i32) {
    %c0_i32 = arith.constant 0 : i32
    %c0_i32_0 = arith.constant 0 : i32
    %c0_i32_1 = arith.constant 0 : i32
    return %arg0, %c0_i32, %c0_i32_0 : i32, i32, i32
  }
}

</mosaic_0001>

<llo_original>
// kernel: scse_forward.1
$region0: #{scse_forward.1}
  #allocation0 [shape = 'u32[]', space=smem, size = 0x4, offset = 0x4, fixed_abs, tag = 'smem constant byte address 0x4 - core index']
  #allocation1 [shape = 'u32[72,128]{1,0:T(1,128)}', space=vmem, size = 0x9000, scoped, tag = 'internal scratch']
  #allocation2 [shape = 'f32[1,1]{1,0:T(1,128)S(1)}', space=vmem, size = 0x200, scoped, tag = 'scoped memory for scse_forward.1']
  %s0 = inlined_call_operand.vmem [shape: f32[2,16,256], index: 0, kind: input, shape index: {}]
  %s1 = inlined_call_operand.vmem [shape: f32[4,16], index: 1, kind: input, shape index: {}]
  %s2 = inlined_call_operand.vmem [shape: f32[4,1], index: 2, kind: input, shape index: {}]
  %s3 = inlined_call_operand.vmem [shape: f32[16,4], index: 3, kind: input, shape index: {}]
  %s4 = inlined_call_operand.vmem [shape: f32[16,1], index: 4, kind: input, shape index: {}]
  %s5 = inlined_call_operand.vmem [shape: f32[1,16], index: 5, kind: input, shape index: {}]
  %s6 = inlined_call_operand.<no memory space> [shape: f32[1,1], index: 6, kind: input, shape index: {}]
  %s7 = inlined_call_operand.vmem [shape: f32[2,16,256], index: 7, kind: output, shape index: {}]
  %s8 = sld [smem:[#allocation0]]
  $region61: #{scse_forward.1} parent=0
    _
  %s10 = ssub.s32 1, %s8
  %s11 = scalar_select 0, %s10, %s8
  %v12 = vstv %s6
  %13 = vst [vmem:[#allocation2] sm:$0x1] %v12
  loop: start=0, step=1, limit=4
  $region2: #{scse_forward.1} parent=0 // loop_pre_header
    _
  $region3: #{scse_forward.1} parent=0 // loop_header
    %s15 = sphi 0, %s19
    %p16 = scmp.ge.s32.totalorder %s15, 4
    %s25 = sphi 0, %s27
    %s28 = sphi 0, %s25
    %s29 = sphi 0, %s28
    %s45 = sphi 0, %s29
    %s49 = sphi 0, %s49
    %s51 = sphi 0, %s49
    %s52 = sphi 0, %s51
    %s66 = sphi 0, %s52
    %s70 = sphi 0, %s70
    %s72 = sphi 0, %s70
    %s73 = sphi 0, %s72
    %s87 = sphi 0, %s73
    %s91 = sphi 0, %s91
    %s93 = sphi 0, %s91
    %s94 = sphi 0, %s93
    %s108 = sphi 0, %s94
    %s112 = sphi 0, %s112
    %s114 = sphi 0, %s112
    %s115 = sphi 0, %s114
    %s129 = sphi 0, %s115
    %s133 = sphi 0, %s133
    %s135 = sphi 0, %s133
    %s136 = sphi 0, %s135
    %s150 = sphi 0, %s136
    %s154 = sphi 0, %s154
    %s156 = sphi 0, %s154
    %s157 = sphi 0, %s156
    %s171 = sphi 0, %s157
    %s177 = sphi 0, %s179
    %s180 = sphi 0, %s177
    %s181 = sphi 0, %s180
    %s197 = sphi 0, %s181
  $region4: #{scse_forward.1} parent=0 // loop_header_branch
    %18 = sbr.rel (%p16) target = $region8
  $region5: #{scse_forward.1} parent=0 // loop_body
    %s20 = ssub.s32 %s15, 1
    %s21 = ssub.s32 %s15, 2
    %s22 = sadd.s32 %s15, 1
    %s23 = ssub.s32 %s15, %s22
    %p24 = scmp.eq.s32.totalorder %s23, 0
    %s26 = sadd.s32 %s25, 1
    %s27 = scalar_select %p24, %s25, %s26
    %p30 = pneg %p24
    %p31 = scmp.eq.s32.totalorder %s15, 1
    %p32 = por %p30, %p31
    %p33 = scmp.ne.s32.totalorder %s25, %s28
    %p34 = scmp.eq.s32.totalorder %s15, 0
    %p35 = por %p33, %p34
    %p36 = scmp.ne.s32.totalorder %s25, %s28
    %p37 = scmp.eq.s32.totalorder %s20, 1
    %p38 = por %p36, %p37
    %p39 = scmp.ne.s32.totalorder %s28, %s29
    %p40 = scmp.eq.s32.totalorder %s20, 0
    %p41 = por %p39, %p40
    %p42 = scmp.ne.s32.totalorder %s28, %s29
    %p43 = scmp.eq.s32.totalorder %s21, 1
    %p44 = por %p42, %p43
    %p46 = scmp.ne.s32.totalorder %s29, %s45
    %p47 = scmp.eq.s32.totalorder %s21, 0
    %p48 = por %p46, %p47
    %s50 = sadd.s32 %s49, 1
    %p53 = scmp.eq.s32.totalorder %s15, 1
    %p54 = scmp.ne.s32.totalorder %s49, %s51
    %p55 = scmp.eq.s32.totalorder %s15, 0
    %p56 = por %p54, %p55
    %p57 = scmp.ne.s32.totalorder %s49, %s51
    %p58 = scmp.eq.s32.totalorder %s20, 1
    %p59 = por %p57, %p58
    %p60 = scmp.ne.s32.totalorder %s51, %s52
    %p61 = scmp.eq.s32.totalorder %s20, 0
    %p62 = por %p60, %p61
    %p63 = scmp.ne.s32.totalorder %s51, %s52
    %p64 = scmp.eq.s32.totalorder %s21, 1
    %p65 = por %p63, %p64
    %p67 = scmp.ne.s32.totalorder %s52, %s66
    %p68 = scmp.eq.s32.totalorder %s21, 0
    %p69 = por %p67, %p68
    %s71 = sadd.s32 %s70, 1
    %p74 = scmp.eq.s32.totalorder %s15, 1
    %p75 = scmp.ne.s32.totalorder %s70, %s72
    %p76 = scmp.eq.s32.totalorder %s15, 0
    %p77 = por %p75, %p76
    %p78 = scmp.ne.s32.totalorder %s70, %s72
    %p79 = scmp.eq.s32.totalorder %s20, 1
    %p80 = por %p78, %p79
    %p81 = scmp.ne.s32.totalorder %s72, %s73
    %p82 = scmp.eq.s32.totalorder %s20, 0
    %p83 = por %p81, %p82
    %p84 = scmp.ne.s32.totalorder %s72, %s73
    %p85 = scmp.eq.s32.totalorder %s21, 1
    %p86 = por %p84, %p85
    %p88 = scmp.ne.s32.totalorder %s73, %s87
    %p89 = scmp.eq.s32.totalorder %s21, 0
    %p90 = por %p88, %p89
    %s92 = sadd.s32 %s91, 1
    %p95 = scmp.eq.s32.totalorder %s15, 1
    %p96 = scmp.ne.s32.totalorder %s91, %s93
    %p97 = scmp.eq.s32.totalorder %s15, 0
    %p98 = por %p96, %p97
    %p99 = scmp.ne.s32.totalorder %s91, %s93
    %p100 = scmp.eq.s32.totalorder %s20, 1
    %p101 = por %p99, %p100
    %p102 = scmp.ne.s32.totalorder %s93, %s94
    %p103 = scmp.eq.s32.totalorder %s20, 0
    %p104 = por %p102, %p103
    %p105 = scmp.ne.s32.totalorder %s93, %s94
    %p106 = scmp.eq.s32.totalorder %s21, 1
    %p107 = por %p105, %p106
    %p109 = scmp.ne.s32.totalorder %s94, %s108
    %p110 = scmp.eq.s32.totalorder %s21, 0
    %p111 = por %p109, %p110
    %s113 = sadd.s32 %s112, 1
    %p116 = scmp.eq.s32.totalorder %s15, 1
    %p117 = scmp.ne.s32.totalorder %s112, %s114
    %p118 = scmp.eq.s32.totalorder %s15, 0
    %p119 = por %p117, %p118
    %p120 = scmp.ne.s32.totalorder %s112, %s114
    %p121 = scmp.eq.s32.totalorder %s20, 1
    %p122 = por %p120, %p121
    %p123 = scmp.ne.s32.totalorder %s114, %s115
    %p124 = scmp.eq.s32.totalorder %s20, 0
    %p125 = por %p123, %p124
    %p126 = scmp.ne.s32.totalorder %s114, %s115
    %p127 = scmp.eq.s32.totalorder %s21, 1
    %p128 = por %p126, %p127
    %p130 = scmp.ne.s32.totalorder %s115, %s129
    %p131 = scmp.eq.s32.totalorder %s21, 0
    %p132 = por %p130, %p131
    %s134 = sadd.s32 %s133, 1
    %p137 = scmp.eq.s32.totalorder %s15, 1
    %p138 = scmp.ne.s32.totalorder %s133, %s135
    %p139 = scmp.eq.s32.totalorder %s15, 0
    %p140 = por %p138, %p139
    %p141 = scmp.ne.s32.totalorder %s133, %s135
    %p142 = scmp.eq.s32.totalorder %s20, 1
    %p143 = por %p141, %p142
    %p144 = scmp.ne.s32.totalorder %s135, %s136
    %p145 = scmp.eq.s32.totalorder %s20, 0
    %p146 = por %p144, %p145
    %p147 = scmp.ne.s32.totalorder %s135, %s136
    %p148 = scmp.eq.s32.totalorder %s21, 1
    %p149 = por %p147, %p148
    %p151 = scmp.ne.s32.totalorder %s136, %s150
    %p152 = scmp.eq.s32.totalorder %s21, 0
    %p153 = por %p151, %p152
    %s155 = sadd.s32 %s154, 1
    %p158 = scmp.eq.s32.totalorder %s15, 1
    %p159 = scmp.ne.s32.totalorder %s154, %s156
    %p160 = scmp.eq.s32.totalorder %s15, 0
    %p161 = por %p159, %p160
    %p162 = scmp.ne.s32.totalorder %s154, %s156
    %p163 = scmp.eq.s32.totalorder %s20, 1
    %p164 = por %p162, %p163
    %p165 = scmp.ne.s32.totalorder %s156, %s157
    %p166 = scmp.eq.s32.totalorder %s20, 0
    %p167 = por %p165, %p166
    %p168 = scmp.ne.s32.totalorder %s156, %s157
    %p169 = scmp.eq.s32.totalorder %s21, 1
    %p170 = por %p168, %p169
    %p172 = scmp.ne.s32.totalorder %s157, %s171
    %p173 = scmp.eq.s32.totalorder %s21, 0
    %p174 = por %p172, %p173
    %s175 = ssub.s32 %s15, %s22
    %p176 = scmp.eq.s32.totalorder %s175, 0
    %s178 = sadd.s32 %s177, 1
    %s179 = scalar_select %p176, %s177, %s178
    %p182 = pneg %p176
    %p183 = scmp.eq.s32.totalorder %s15, 1
    %p184 = por %p182, %p183
    %p185 = scmp.ne.s32.totalorder %s177, %s180
    %p186 = scmp.eq.s32.totalorder %s15, 0
    %p187 = por %p185, %p186
    %p188 = scmp.ne.s32.totalorder %s177, %s180
    %p189 = scmp.eq.s32.totalorder %s20, 1
    %p190 = por %p188, %p189
    %p191 = scmp.ne.s32.totalorder %s180, %s181
    %p192 = scmp.eq.s32.totalorder %s20, 0
    %p193 = por %p191, %p192
    %p194 = scmp.ne.s32.totalorder %s180, %s181
    %p195 = scmp.eq.s32.totalorder %s21, 1
    %p196 = por %p194, %p195
    %p198 = scmp.ne.s32.totalorder %s181, %s197
    %p199 = scmp.eq.s32.totalorder %s21, 0
    %p200 = por %p198, %p199
    %p201 = scmp.le.s32.totalorder 1, %s15
    %p202 = scmp.lt.s32.totalorder %s15, 3
    %p203 = pnand %p201, %p202
    %p204 = pneg %p203
    // Predicated region
    $region9: #{scse_forward.1} parent=5 // pred_check
      _
    $region10: #{scse_forward.1} parent=5 // pred_check_branch
      %206 = sbr.rel (%p203) target = $region12
    $region11: #{scse_forward.1} parent=5 // pred_region
      %s207 = ssub.s32 %s15, 1
      // Predicated region
      $region13: #{scse_forward.1} parent=11 // pred_check
        %p208 = pneg %p62
      $region14: #{scse_forward.1} parent=11 // pred_check_branch
        %210 = sbr.rel (%p208) target = $region16
      $region15: #{scse_forward.1} parent=11 // pred_region
        _
      $region16: #{scse_forward.1} parent=11 // pred_fallthru
        _
      // Predicated region
      $region17: #{scse_forward.1} parent=11 // pred_check
        %p211 = pneg %p83
      $region18: #{scse_forward.1} parent=11 // pred_check_branch
        %213 = sbr.rel (%p211) target = $region20
      $region19: #{scse_forward.1} parent=11 // pred_region
        _
      $region20: #{scse_forward.1} parent=11 // pred_fallthru
        _
      // Predicated region
      $region21: #{scse_forward.1} parent=11 // pred_check
        %p214 = pneg %p104
      $region22: #{scse_forward.1} parent=11 // pred_check_branch
        %216 = sbr.rel (%p214) target = $region24
      $region23: #{scse_forward.1} parent=11 // pred_region
        _
      $region24: #{scse_forward.1} parent=11 // pred_fallthru
        _
      // Predicated region
      $region25: #{scse_forward.1} parent=11 // pred_check
        %p217 = pneg %p125
      $region26: #{scse_forward.1} parent=11 // pred_check_branch
        %219 = sbr.rel (%p217) target = $region28
      $region27: #{scse_forward.1} parent=11 // pred_region
        _
      $region28: #{scse_forward.1} parent=11 // pred_fallthru
        _
      // Predicated region
      $region29: #{scse_forward.1} parent=11 // pred_check
        %p220 = pneg %p146
      $region30: #{scse_forward.1} parent=11 // pred_check_branch
        %222 = sbr.rel (%p220) target = $region32
      $region31: #{scse_forward.1} parent=11 // pred_region
        _
      $region32: #{scse_forward.1} parent=11 // pred_fallthru
        _
      // Predicated region
      $region33: #{scse_forward.1} parent=11 // pred_check
        %p223 = pneg %p167
      $region34: #{scse_forward.1} parent=11 // pred_check_branch
        %225 = sbr.rel (%p223) target = $region36
      $region35: #{scse_forward.1} parent=11 // pred_region
        _
      $region36: #{scse_forward.1} parent=11 // pred_fallthru
        _
    $region12: #{scse_forward.1} parent=5 // pred_fallthru
      _
    %p226 = scmp.lt.s32.totalorder %s15, 2
    // Predicated region
    $region37: #{scse_forward.1} parent=5 // pred_check
      %p227 = pneg %p226
    $region38: #{scse_forward.1} parent=5 // pred_check_branch
      %229 = sbr.rel (%p227) target = $region40
    $region39: #{scse_forward.1} parent=5 // pred_region
      // Predicated region
      $region41: #{scse_forward.1} parent=39 // pred_check
        %p230 = pneg %p35
      $region42: #{scse_forward.1} parent=39 // pred_check_branch
        %232 = sbr.rel (%p230) target = $region44
      $region43: #{scse_forward.1} parent=39 // pred_region
        %p233 = scmp.lt.s32.totalorder %s15, 1
        %s234 = scalar_select %p233, %s15, 1
        %s235 = smul.addr %s234, 4
        %s236 = smul.addr %s235, 8
        %s237 = scalar_lea.vmem %s0, %s236
      $region44: #{scse_forward.1} parent=39 // pred_fallthru
        _
    $region40: #{scse_forward.1} parent=5 // pred_fallthru
      _
    %p238 = scmp.le.s32.totalorder 1, %s15
    %p239 = scmp.lt.s32.totalorder %s15, 3
    %p240 = pnand %p238, %p239
    %p241 = pneg %p240
    // Predicated region
    $region45: #{scse_forward.1} parent=5 // pred_check
      _
    $region46: #{scse_forward.1} parent=5 // pred_check_branch
      %243 = sbr.rel (%p240) target = $region48
    $region47: #{scse_forward.1} parent=5 // pred_region
      %s244 = ssub.s32 %s15, 1
      %p245 = scmp.lt.s32.totalorder %s20, 1
      %s246 = scalar_select %p245, %s20, 1
      %s247 = smul.addr %s246, 4
      %s248 = smul.addr %s247, 8
      %s249 = scalar_lea.vmem %s0, %s248
      %p250 = pneg %p41
      %p251 = pneg %p38
      %p252 = pneg %p62
      %p253 = pneg %p59
      %p254 = pneg %p83
      %p255 = pneg %p80
      %p256 = pneg %p104
      %p257 = pneg %p101
      %p258 = pneg %p125
      %p259 = pneg %p122
      %p260 = pneg %p146
      %p261 = pneg %p143
      %p262 = pneg %p167
      %p263 = pneg %p164
      %p264 = pneg %p193
      %p265 = pneg %p190
      %p266 = scmp.lt.s32.totalorder %s20, 1
      %s267 = scalar_select %p266, %s20, 1
      %s268 = smul.addr %s267, 4
      %s269 = smul.addr %s268, 8
      %s270 = scalar_lea.vmem %s7, %s269
      %p271 = scmp.lt.s32.totalorder %s20, 1
      %s272 = scalar_select %p271, %s20, 1
      %s273 = smul.addr %s272, 4
      %s274 = smul.addr %s273, 8
      %s275 = scalar_lea.vmem %s0, %s274
      %p276 = scmp.lt.s32.totalorder %s20, 1
      %s277 = scalar_select %p276, %s20, 1
      %s278 = smul.addr %s277, 4
      %s279 = smul.addr %s278, 8
      %s280 = scalar_lea.vmem %s7, %s279
      %v281 = vld [vmem:[%s275] sm:$0xff]
      %v282 = vld [vmem:[%s275 + $0x8] sm:$0xff]
      %v283 = vld [vmem:[%s275 + $0x10] sm:$0xff]
      %v284 = vld [vmem:[%s275 + $0x18] sm:$0xff]
      %285 = vmatpush.msra.mxu0 1.0
      %286 = vmatpush.msra.mxu0 1.0
      %287 = vmatpush.msra.mxu0 1.0
      %288 = vmatpush.msra.mxu0 1.0
      %289 = vmatpush.msra.mxu0 1.0
      %290 = vmatpush.msra.mxu0 1.0
      %291 = vmatpush.msra.mxu0 1.0
      %292 = vmatpush.msra.mxu0 1.0
      %293 = vmatpush.msra.mxu0 1.0
      %294 = vmatpush.msra.mxu0 1.0
      %295 = vmatpush.msra.mxu0 1.0
      %296 = vmatpush.msra.mxu0 1.0
      %297 = vmatpush.msra.mxu0 1.0
      %298 = vmatpush.msra.mxu0 1.0
      %299 = vmatpush.msra.mxu0 1.0
      %300 = vmatpush.msra.mxu0 1.0
      %301 = vmatmul.f32.gmra.mxu0 %v281
      %v302 = vpop.f32.mrf.mxu0
      %v303 = vadd.f32 0.0, %v302
      %304 = vmatmul.f32.gmra.mxu0 %v283
      %v305 = vpop.f32.mrf.mxu0
      %v306 = vadd.f32 0.0, %v305
      %307 = vdwg.mxu0
      %308 = vmatpush.msra.mxu0 1.0
      %309 = vmatpush.msra.mxu0 1.0
      %310 = vmatpush.msra.mxu0 1.0
      %311 = vmatpush.msra.mxu0 1.0
      %312 = vmatpush.msra.mxu0 1.0
      %313 = vmatpush.msra.mxu0 1.0
      %314 = vmatpush.msra.mxu0 1.0
      %315 = vmatpush.msra.mxu0 1.0
      %316 = vmatpush.msra.mxu0 1.0
      %317 = vmatpush.msra.mxu0 1.0
      %318 = vmatpush.msra.mxu0 1.0
      %319 = vmatpush.msra.mxu0 1.0
      %320 = vmatpush.msra.mxu0 1.0
      %321 = vmatpush.msra.mxu0 1.0
      %322 = vmatpush.msra.mxu0 1.0
      %323 = vmatpush.msra.mxu0 1.0
      %324 = vmatmul.f32.gmra.mxu0 %v282
      %v325 = vpop.f32.mrf.mxu0
      %v326 = vadd.f32 %v303, %v325
      %327 = vmatmul.f32.gmra.mxu0 %v284
      %v328 = vpop.f32.mrf.mxu0
      %v329 = vadd.f32 %v306, %v328
      %330 = vdwg.mxu0
      %v331 = vmul.f32 %v326, 0.00390625
      %v332 = vmul.f32 %v329, 0.00390625
      %v333 = vld [vmem:[%s1] sm:$0xf]
      %v334 = vld [vmem:[%s2] sm:$0xf]
      %vm335 = vcmask 130048
      %v337 = vsel %vm335, %v333, 0
      %339 = vmatpush.msra.mxu0 0.0
      %340 = vmatpush.msra.mxu0 0.0
      %341 = vmatpush.msra.mxu0 0.0
      %342 = vmatpush.msra.mxu0 0.0
      %343 = vmatpush.msra.mxu0 0.0
      %344 = vmatpush.msra.mxu0 0.0
      %345 = vmatpush.msra.mxu0 0.0
      %346 = vmatpush.msra.mxu0 0.0
      %347 = vmatpush.msra.mxu0 0.0
      %348 = vmatpush.msra.mxu0 0.0
      %349 = vmatpush.msra.mxu0 0.0
      %350 = vmatpush.msra.mxu0 0.0
      %351 = vmatpush.msra.mxu0 0.0
      %352 = vmatpush.msra.mxu0 0.0
      %353 = vmatpush.msra.mxu0 %v332
      %354 = vmatpush.msra.mxu0 %v331
      %355 = vmatmul.f32.gmra.mxu0 %v337
      %v356 = vpop.f32.mrf.mxu0
      %v357 = vadd.f32 %v334, %v356
      %358 = vdwg.mxu0
      %v359 = vmax.f32 %v357, 0.0
      %v360 = vld [vmem:[%s3] sm:$0xff]
      %v361 = vld [vmem:[%s3 + $0x8] sm:$0xff]
      %v362 = vld [vmem:[%s4] sm:$0xff]
      %v363 = vld [vmem:[%s4 + $0x8] sm:$0xff]
      %vm364 = vcmask 31744
      %v366 = vsel %vm364, %v360, 0
      %v369 = vsel %vm364, %v361, 0
      %vm371 = vcmask 1043456
      %v373 = vsel %vm371, %v359, 0
      %375 = vmatpush.msra.mxu0 0.0
      %376 = vmatpush.msra.mxu0 0.0
      %377 = vmatpush.msra.mxu0 0.0
      %378 = vmatpush.msra.mxu0 0.0
      %379 = vmatpush.msra.mxu0 0.0
      %380 = vmatpush.msra.mxu0 0.0
      %381 = vmatpush.msra.mxu0 0.0
      %382 = vmatpush.msra.mxu0 0.0
      %383 = vmatpush.msra.mxu0 0.0
      %384 = vmatpush.msra.mxu0 0.0
      %385 = vmatpush.msra.mxu0 0.0
      %386 = vmatpush.msra.mxu0 0.0
      %387 = vmatpush.msra.mxu0 0.0
      %388 = vmatpush.msra.mxu0 0.0
      %389 = vmatpush.msra.mxu0 0.0
      %390 = vmatpush.msra.mxu0 %v373
      %391 = vmatmul.f32.gmra.mxu0 %v366
      %v392 = vpop.f32.mrf.mxu0
      %v393 = vadd.f32 %v362, %v392
      %394 = vmatmul.f32.gmra.mxu0 %v369
      %v395 = vpop.f32.mrf.mxu0
      %v396 = vadd.f32 %v363, %v395
      %397 = vdwg.mxu0
      %v398 = vxor.u32 %v393, 2147483648
      %v399 = vxor.u32 %v396, 2147483648
      %v400 = vmul.f32 %v398, 1.442695
      %v401 = vpow.pop %v400
      %v402 = vmul.f32 %v399, 1.442695
      %v403 = vpow.pop %v402
      %v404 = vadd.f32 %v401, 1.0
      %v405 = vadd.f32 %v403, 1.0
      %v406 = vrcp.pop %v404
      %v407 = vmul.f32 %v404, %v406
      %v408 = vsub.f32 1.0, %v407
      %v409 = vmul.f32 %v406, %v408
      %v410 = vadd.f32 %v406, %v409
      %vm411 = vweird.f32 %v404
      %vm412 = vweird.f32 %v406
      %vm413 = vmor %vm411, %vm412
      %v414 = vsel %vm413, %v406, %v410
      %v415 = vand.u32 2147483647, %v404
      %vm416 = vcmp.eq.f32.partialorder %v415, 8.507059e+37
      %v417 = vand.u32 %v404, 2147483648
      %v418 = vor.u32 1.1754944e-38, %v417
      %v419 = vsel %vm416, %v418, %v414
      %v420 = vmul.f32 1.0, %v419
      %v421 = vrcp.pop %v405
      %v422 = vmul.f32 %v405, %v421
      %v423 = vsub.f32 1.0, %v422
      %v424 = vmul.f32 %v421, %v423
      %v425 = vadd.f32 %v421, %v424
      %vm426 = vweird.f32 %v405
      %vm427 = vweird.f32 %v421
      %vm428 = vmor %vm426, %vm427
      %v429 = vsel %vm428, %v421, %v425
      %v430 = vand.u32 2147483647, %v405
      %vm431 = vcmp.eq.f32.partialorder %v430, 8.507059e+37
      %v432 = vand.u32 %v405, 2147483648
      %v433 = vor.u32 1.1754944e-38, %v432
      %v434 = vsel %vm431, %v433, %v429
      %v435 = vmul.f32 1.0, %v434
      %v436 = vld [vmem:[%s5] sm:$0x1]
      %v437 = vld [vmem:[#allocation2] sm:$0x1]
      %439 = vset.pattern.permute.xlu0 0
      %440 = vperm.xlu0 %439, %v437
      %v441 = vpop.permute.xlu0 %440
      %v443 = vperm.slane %v441, 0
      %v445 = vsel %vm335, %v436, 0
      %447 = vmatpush.msra.mxu0 0.0
      %448 = vmatpush.msra.mxu0 0.0
      %449 = vmatpush.msra.mxu0 0.0
      %450 = vmatpush.msra.mxu0 0.0
      %451 = vmatpush.msra.mxu0 0.0
      %452 = vmatpush.msra.mxu0 0.0
      %453 = vmatpush.msra.mxu0 0.0
      %454 = vmatpush.msra.mxu0 0.0
      %455 = vmatpush.msra.mxu0 0.0
      %456 = vmatpush.msra.mxu0 0.0
      %457 = vmatpush.msra.mxu0 0.0
      %458 = vmatpush.msra.mxu0 0.0
      %459 = vmatpush.msra.mxu0 0.0
      %460 = vmatpush.msra.mxu0 0.0
      %461 = vmatpush.msra.mxu0 %v283
      %462 = vmatpush.msra.mxu0 %v281
      %463 = vmatmul.f32.gmra.mxu0 %v445
      %v464 = vpop.f32.mrf.mxu0
      %v465 = vadd.f32 %v443, %v464
      %466 = vdwg.mxu0
      %467 = vmatpush.msra.mxu0 0.0
      %468 = vmatpush.msra.mxu0 0.0
      %469 = vmatpush.msra.mxu0 0.0
      %470 = vmatpush.msra.mxu0 0.0
      %471 = vmatpush.msra.mxu0 0.0
      %472 = vmatpush.msra.mxu0 0.0
      %473 = vmatpush.msra.mxu0 0.0
      %474 = vmatpush.msra.mxu0 0.0
      %475 = vmatpush.msra.mxu0 0.0
      %476 = vmatpush.msra.mxu0 0.0
      %477 = vmatpush.msra.mxu0 0.0
      %478 = vmatpush.msra.mxu0 0.0
      %479 = vmatpush.msra.mxu0 0.0
      %480 = vmatpush.msra.mxu0 0.0
      %481 = vmatpush.msra.mxu0 %v284
      %482 = vmatpush.msra.mxu0 %v282
      %483 = vmatmul.f32.gmra.mxu0 %v445
      %v484 = vpop.f32.mrf.mxu0
      %v485 = vadd.f32 %v443, %v484
      %486 = vdwg.mxu0
      %v487 = vxor.u32 %v465, 2147483648
      %v488 = vxor.u32 %v485, 2147483648
      %v489 = vmul.f32 %v487, 1.442695
      %v490 = vpow.pop %v489
      %v491 = vmul.f32 %v488, 1.442695
      %v492 = vpow.pop %v491
      %v493 = vadd.f32 %v490, 1.0
      %v494 = vadd.f32 %v492, 1.0
      %v495 = vrcp.pop %v493
      %v496 = vmul.f32 %v493, %v495
      %v497 = vsub.f32 1.0, %v496
      %v498 = vmul.f32 %v495, %v497
      %v499 = vadd.f32 %v495, %v498
      %vm500 = vweird.f32 %v493
      %vm501 = vweird.f32 %v495
      %vm502 = vmor %vm500, %vm501
      %v503 = vsel %vm502, %v495, %v499
      %v504 = vand.u32 2147483647, %v493
      %vm505 = vcmp.eq.f32.partialorder %v504, 8.507059e+37
      %v506 = vand.u32 %v493, 2147483648
      %v507 = vor.u32 1.1754944e-38, %v506
      %v508 = vsel %vm505, %v507, %v503
      %v509 = vmul.f32 1.0, %v508
      %v510 = vrcp.pop %v494
      %v511 = vmul.f32 %v494, %v510
      %v512 = vsub.f32 1.0, %v511
      %v513 = vmul.f32 %v510, %v512
      %v514 = vadd.f32 %v510, %v513
      %vm515 = vweird.f32 %v494
      %vm516 = vweird.f32 %v510
      %vm517 = vmor %vm515, %vm516
      %v518 = vsel %vm517, %v510, %v514
      %v519 = vand.u32 2147483647, %v494
      %vm520 = vcmp.eq.f32.partialorder %v519, 8.507059e+37
      %v521 = vand.u32 %v494, 2147483648
      %v522 = vor.u32 1.1754944e-38, %v521
      %v523 = vsel %vm520, %v522, %v518
      %v524 = vmul.f32 1.0, %v523
      %526 = vset.pattern.permute.xlu0 0
      %527 = vperm.xlu0 %526, %v420
      %v528 = vpop.permute.xlu0 %527
      %531 = vset.pattern.permute.xlu0 0
      %532 = vperm.xlu0 %531, %v435
      %v533 = vpop.permute.xlu0 %532
      %v535 = vperm.slane %v509, 0
      %v536 = vperm.slane %v524, 0
      %v537 = vadd.f32 %v528, %v535
      %v538 = vadd.f32 %v528, %v536
      %v539 = vadd.f32 %v533, %v535
      %v540 = vadd.f32 %v533, %v536
      %v541 = vmul.f32 %v281, %v537
      %v542 = vmul.f32 %v282, %v538
      %v543 = vmul.f32 %v283, %v539
      %v544 = vmul.f32 %v284, %v540
      %545 = vst [vmem:[%s280] sm:$0xff] %v541
      %546 = vst [vmem:[%s280 + $0x8] sm:$0xff] %v542
      %547 = vst [vmem:[%s280 + $0x10] sm:$0xff] %v543
      %548 = vst [vmem:[%s280 + $0x18] sm:$0xff] %v544
      %p549 = scmp.lt.s32.totalorder %s20, 1
      %s550 = scalar_select %p549, %s20, 1
      %s551 = smul.addr %s550, 4
      %s552 = smul.addr %s551, 8
      %s553 = scalar_lea.vmem %s7, %s552
      // Predicated region
      $region49: #{scse_forward.1} parent=47 // pred_check
        %p554 = pneg %p190
      $region50: #{scse_forward.1} parent=47 // pred_check_branch
        %556 = sbr.rel (%p554) target = $region52
      $region51: #{scse_forward.1} parent=47 // pred_region
        _
      $region52: #{scse_forward.1} parent=47 // pred_fallthru
        _
    $region48: #{scse_forward.1} parent=5 // pred_fallthru
      _
    %p557 = scmp.le.s32.totalorder 2, %s15
    // Predicated region
    $region53: #{scse_forward.1} parent=5 // pred_check
      %p558 = pneg %p557
    $region54: #{scse_forward.1} parent=5 // pred_check_branch
      %560 = sbr.rel (%p558) target = $region56
    $region55: #{scse_forward.1} parent=5 // pred_region
      %s561 = ssub.s32 %s15, 2
      // Predicated region
      $region57: #{scse_forward.1} parent=55 // pred_check
        %p562 = pneg %p196
      $region58: #{scse_forward.1} parent=55 // pred_check_branch
        %564 = sbr.rel (%p562) target = $region60
      $region59: #{scse_forward.1} parent=55 // pred_region
        %p565 = scmp.lt.s32.totalorder %s21, 1
        %s566 = scalar_select %p565, %s21, 1
        %s567 = smul.addr %s566, 4
        %s568 = smul.addr %s567, 8
        %s569 = scalar_lea.vmem %s7, %s568
      $region60: #{scse_forward.1} parent=55 // pred_fallthru
        _
    $region56: #{scse_forward.1} parent=5 // pred_fallthru
      _
  $region6: #{scse_forward.1} parent=0 // loop_footer
    %s19 = sadd.s32 1, %s15
  $region7: #{scse_forward.1} parent=0 // loop_footer_branch
    %14 = sbr.rel target = $region3
  $region8: #{scse_forward.1} parent=0 // loop_exit
    _

</llo_original>
